<compile_context>
chip_gen: v7x
topology: tpu7x:2x2x1
jax: 0.10.0
libtpu: 0.0.40
codegen_flags: <defaults>
</compile_context>

<pallas_src>
import functools

import jax
import jax.numpy as jnp
from jax import lax
from jax.experimental import pallas as pl
from jax.experimental.pallas import tpu as pltpu

# ---------------- model dimensions (small synthetic config) ----------------
BATCH = 256           # real batch dim so the grid/tiling is exercised
TILE_B = 128          # rows per grid step (multiple of 8 sublanes)
TEXT_HIDDEN = 32      # self.text_hidden_size
IMAGE_HIDDEN = 48     # self.image_hidden_size
ECG_HIDDEN = 24       # self.ecg_hidden_size
ATTN_HIDDEN = 16      # MultiHeadCrossAttention hidden_dim
NUM_HEADS = 2         # MultiHeadCrossAttention num_heads
NUM_CLASSES = 100     # create_mlp(..., task='diagnosis_classification') -> 100
PADDED_CLASSES = 128  # lane-dense output store; sliced back to 100 outside
COMBINED_HIDDEN = IMAGE_HIDDEN + TEXT_HIDDEN + ECG_HIDDEN   # 104
IE_HIDDEN = IMAGE_HIDDEN + ECG_HIDDEN                       # 72
BIAS_WIDTH = 256      # packed-bias blob (b2 placed at lane 128, lane-aligned)


# ---------------------------- Pallas kernels -------------------------------
def _mlp_head_kernel(x_ref, w1_ref, b1_ref, w2_ref, b2_ref, o_ref):
    """Generic 2-layer MLP head: relu(x@W1+b1)@W2+b2 (Dropout = identity, eval).

    Used for BOTH early 'concatenate' fusion (W1 = head.W1) and late fusion
    (W1 block-diagonal over the three per-modality heads, W2 stacked and
    pre-scaled by 1/3).
    """
    h = jnp.dot(x_ref[...], w1_ref[...],
                preferred_element_type=jnp.float32) + b1_ref[...]
    h = jnp.maximum(h, 0.0)
    o_ref[...] = (jnp.dot(h, w2_ref[...], preferred_element_type=jnp.float32)
                  + b2_ref[...]).astype(o_ref.dtype)


def _xattn_head_kernel(txt_ref, ie_ref, wq_ref, wk_ref, wv_ref, wo_ref,
                       w1_ref, w2_ref, bias_ref, o_ref,
                       *, num_heads, head_dim):
    """Early fusion, technique='cross_attention', fused with the MLP head.

    txt_ref is a (tile_B, text_hidden) Q-row tile; ie_ref is the FULL-batch
    (B, 72) img||ecg tensor (VMEM-resident via constant index_map), so the
    batch-wide attention of the PyTorch reference is preserved under tiling.
    All heads share one wide matmul per Q/K/V projection; the per-head
    softmax is a static unroll (H=2); both head outputs are concatenated and
    projected by the full wo in a single matmul.
    """
    HD = num_heads * head_dim
    bias = bias_ref[...]                                  # (1, 256) packed blob
    bq = bias[:, 0:HD]
    bk = bias[:, HD:2 * HD]
    bv = bias[:, 2 * HD:3 * HD]
    bo = bias[:, 3 * HD:3 * HD + head_dim]
    b1 = bias[:, 3 * HD + head_dim:3 * HD + head_dim + head_dim // 2]
    b2 = bias[:, 128:128 + PADDED_CLASSES]                # lane-aligned slice

    txt = txt_ref[...]
    ie = ie_ref[...]
    q_all = jnp.dot(txt, wq_ref[...], preferred_element_type=jnp.float32) + bq
    k_all = jnp.dot(ie, wk_ref[...], preferred_element_type=jnp.float32) + bk
    v_all = jnp.dot(ie, wv_ref[...], preferred_element_type=jnp.float32) + bv

    inv_scale = 1.0 / (float(head_dim) ** 0.5)
    head_outs = []
    for h in range(num_heads):                            # static unroll (H=2)
        lo = h * head_dim
        q = q_all[:, lo:lo + head_dim]                    # (tile_B, D)
        k = k_all[:, lo:lo + head_dim]                    # (B, D)
        v = v_all[:, lo:lo + head_dim]                    # (B, D)
        # Contract last dims directly (MXU handles the RHS feed; no k.T copy).
        s = lax.dot_general(q, k, (((1,), (1,)), ((), ())),
                            preferred_element_type=jnp.float32) * inv_scale
        s = s - jnp.max(s, axis=-1, keepdims=True)
        p = jnp.exp(s)
        p = p / jnp.sum(p, axis=-1, keepdims=True)        # exact softmax denom
        head_outs.append(jnp.dot(p, v, preferred_element_type=jnp.float32))

    concat = jnp.concatenate(head_outs, axis=-1)          # (tile_B, H*D)
    fused = jnp.dot(concat, wo_ref[...],
                    preferred_element_type=jnp.float32) + bo

    h1 = jnp.maximum(
        jnp.dot(fused, w1_ref[...], preferred_element_type=jnp.float32) + b1,
        0.0)
    o_ref[...] = (jnp.dot(h1, w2_ref[...], preferred_element_type=jnp.float32)
                  + b2).astype(o_ref.dtype)


# --------------------------- pallas_call wrappers ---------------------------
def _tile_for(batch):
    return TILE_B if batch % TILE_B == 0 else batch


def _mlp_head_call(x, w1, b1, w2, b2):
    B, K = x.shape
    tb = _tile_for(B)
    const = lambda b: (0, 0)
    return pl.pallas_call(
        _mlp_head_kernel,
        out_shape=jax.ShapeDtypeStruct((B, PADDED_CLASSES), jnp.float32),
        grid_spec=pltpu.PrefetchScalarGridSpec(
            num_scalar_prefetch=0,
            grid=(B // tb,),
            in_specs=[
                pl.BlockSpec((tb, K), lambda b: (b, 0)),   # features: by batch
                pl.BlockSpec(w1.shape, const),             # weights: resident
                pl.BlockSpec(b1.shape, const),
                pl.BlockSpec(w2.shape, const),
                pl.BlockSpec(b2.shape, const),
            ],
            out_specs=pl.BlockSpec((tb, PADDED_CLASSES), lambda b: (b, 0)),
        ),
        compiler_params=pltpu.CompilerParams(
            dimension_semantics=("parallel",)),
    )(x, w1, b1, w2, b2)


def _xattn_call(txt, ie, attn, head):
    B = txt.shape[0]
    tb = _tile_for(B)
    const = lambda b: (0, 0)
    kernel = functools.partial(_xattn_head_kernel,
                               num_heads=NUM_HEADS, head_dim=ATTN_HIDDEN)
    return pl.pallas_call(
        kernel,
        out_shape=jax.ShapeDtypeStruct((B, PADDED_CLASSES), jnp.float32),
        grid_spec=pltpu.PrefetchScalarGridSpec(
            num_scalar_prefetch=0,
            grid=(B // tb,),
            in_specs=[
                pl.BlockSpec((tb, TEXT_HIDDEN), lambda b: (b, 0)),  # Q tile
                pl.BlockSpec((B, IE_HIDDEN), const),   # full-batch K/V source
                pl.BlockSpec(attn["wq"].shape, const),
                pl.BlockSpec(attn["wk"].shape, const),
                pl.BlockSpec(attn["wv"].shape, const),
                pl.BlockSpec(attn["wo"].shape, const),
                pl.BlockSpec(head["w1"].shape, const),
                pl.BlockSpec(head["w2"].shape, const),
                pl.BlockSpec(attn["bias"].shape, const),
            ],
            out_specs=pl.BlockSpec((tb, PADDED_CLASSES), lambda b: (b, 0)),
        ),
        compiler_params=pltpu.CompilerParams(
            dimension_semantics=("parallel",)),
    )(txt, ie, attn["wq"], attn["wk"], attn["wv"], attn["wo"],
      head["w1"], head["w2"], attn["bias"])


# ------------------------------ forward pass -------------------------------
def forward(params, image_features, text_features, ecg_features=None,
            fusion_technique="concatenate", fusion_stage="early",
            task="diagnosis_classification"):
    B = image_features.shape[0]
    if ecg_features is None:
        ecg_features = jnp.zeros((B, ECG_HIDDEN), jnp.float32)

    if fusion_stage == "early" and fusion_technique != "concatenate":
        ie = jnp.concatenate([image_features, ecg_features], axis=-1)
        padded = _xattn_call(text_features, ie,
                             params["cross_attention"], params["head_xattn"])
    else:
        # Early 'concatenate' and late fusion both reduce to one MLP-head call
        # over the [image | text | ecg] concatenation (late fusion via the
        # block-diagonal / stacked packing done in pack_params).
        combined = jnp.concatenate(
            [image_features, text_features, ecg_features], axis=1)
        head = params["head_concat"] if fusion_stage == "early" else params["late_head"]
        padded = _mlp_head_call(combined, head["w1"], head["b1"],
                                head["w2"], head["b2"])

    if task == "survival_classification":
        # TODO(synk): only valid when the heads are built with out_dim=1
        # ('survival_classification' MLPs); slice width follows that head.
        return jnp.squeeze(padded[:, :1], 1)
    return padded[:, :NUM_CLASSES]


# ------------------------- parameter construction --------------------------
def _linear(key, fan_in, fan_out):
    kw, kb = jax.random.split(key)
    bound = 1.0 / (fan_in ** 0.5)
    w = jax.random.uniform(kw, (fan_in, fan_out), jnp.float32, -bound, bound)
    b = jax.random.uniform(kb, (1, fan_out), jnp.float32, -bound, bound)
    return w, b


def _mlp_torch(key, dim, out_dim=NUM_CLASSES):
    k1, k2 = jax.random.split(key)
    w1, b1 = _linear(k1, dim, dim // 2)
    w2, b2 = _linear(k2, dim // 2, out_dim)
    return {"w1": w1, "b1": b1, "w2": w2, "b2": b2}


def init_torch_params(key):
    """Parameters in the PyTorch module's natural layout (used by the ref)."""
    keys = jax.random.split(key, 9)
    D, H = ATTN_HIDDEN, NUM_HEADS

    def stack_heads(kk, fan_in):
        ws, bs = [], []
        for i in range(H):
            w, b = _linear(jax.random.fold_in(kk, i), fan_in, D)
            ws.append(w)
            bs.append(b)
        return jnp.stack(ws), jnp.stack(bs)        # (H, fan_in, D), (H, 1, D)

    wq, bq = stack_heads(keys[0], TEXT_HIDDEN)
    wk, bk = stack_heads(keys[1], IE_HIDDEN)
    wv, bv = stack_heads(keys[2], IE_HIDDEN)
    wo, bo = _linear(keys[3], H * D, D)            # out_proj

    return {
        "cross_attention": {"wq": wq, "bq": bq, "wk": wk, "bk": bk,
                            "wv": wv, "bv": bv, "wo": wo, "bo": bo},
        "head_concat": _mlp_torch(keys[4], COMBINED_HIDDEN),
        "head_xattn": _mlp_torch(keys[5], ATTN_HIDDEN),
        "text_head": _mlp_torch(keys[6], TEXT_HIDDEN),
        "image_head": _mlp_torch(keys[7], IMAGE_HIDDEN),
        "ecg_head": _mlp_torch(keys[8], ECG_HIDDEN),
    }


def _pad_cols(x):
    return jnp.pad(x, ((0, 0), (0, PADDED_CLASSES - x.shape[1])))


def pack_params(tp):
    """Repack torch-layout params into the kernel-friendly layout."""
    H, D = NUM_HEADS, ATTN_HIDDEN
    ca = tp["cross_attention"]
    # Stack heads along the output dim: one wide matmul per Q/K/V projection.
    wq = jnp.moveaxis(ca["wq"], 0, 1).reshape(TEXT_HIDDEN, H * D)
    wk = jnp.moveaxis(ca["wk"], 0, 1).reshape(IE_HIDDEN, H * D)
    wv = jnp.moveaxis(ca["wv"], 0, 1).reshape(IE_HIDDEN, H * D)

    hx = tp["head_xattn"]
    # Pack all cross-attention/head biases into one (1, 256) blob.
    bias = jnp.zeros((1, BIAS_WIDTH), jnp.float32)
    bias = bias.at[:, 0:H * D].set(ca["bq"].reshape(1, H * D))
    bias = bias.at[:, H * D:2 * H * D].set(ca["bk"].reshape(1, H * D))
    bias = bias.at[:, 2 * H * D:3 * H * D].set(ca["bv"].reshape(1, H * D))
    bias = bias.at[:, 3 * H * D:3 * H * D + D].set(ca["bo"])
    bias = bias.at[:, 3 * H * D + D:3 * H * D + D + D // 2].set(hx["b1"])
    bias = bias.at[:, 128:128 + PADDED_CLASSES].set(_pad_cols(hx["b2"]))

    hc = tp["head_concat"]
    head_concat = {"w1": hc["w1"], "b1": hc["b1"],
                   "w2": _pad_cols(hc["w2"]), "b2": _pad_cols(hc["b2"])}

    # Late fusion packed as one MLP: block-diagonal W1 over [img|txt|ecg],
    # W2 row-stacked with the 1/3 averaging folded in at pack time.
    t, i, e = tp["text_head"], tp["image_head"], tp["ecg_head"]
    ih, th, eh = IMAGE_HIDDEN // 2, TEXT_HIDDEN // 2, ECG_HIDDEN // 2
    w1 = jnp.zeros((COMBINED_HIDDEN, ih + th + eh), jnp.float32)
    w1 = w1.at[0:IMAGE_HIDDEN, 0:ih].set(i["w1"])
    w1 = w1.at[IMAGE_HIDDEN:IMAGE_HIDDEN + TEXT_HIDDEN, ih:ih + th].set(t["w1"])
    w1 = w1.at[IMAGE_HIDDEN + TEXT_HIDDEN:, ih + th:].set(e["w1"])
    b1 = jnp.concatenate([i["b1"], t["b1"], e["b1"]], axis=1)
    w2 = jnp.concatenate([i["w2"], t["w2"], e["w2"]], axis=0) / 3.0
    b2 = (i["b2"] + t["b2"] + e["b2"]) / 3.0
    late_head = {"w1": w1, "b1": b1,
                 "w2": _pad_cols(w2), "b2": _pad_cols(b2)}

    return {
        "cross_attention": {"wq": wq, "wk": wk, "wv": wv,
                            "wo": ca["wo"], "bias": bias},
        "head_xattn": {"w1": hx["w1"], "w2": _pad_cols(hx["w2"])},
        "head_concat": head_concat,
        "late_head": late_head,
    }


# ---------------------------- pure-JAX reference ---------------------------
def _ref_mlp(x, head):
    h = jnp.maximum(x @ head["w1"] + head["b1"], 0.0)
    return h @ head["w2"] + head["b2"]


def _ref_mha(text, img, ecg, ca):
    ie = jnp.concatenate([img, ecg], axis=-1)
    outs = []
    for h in range(NUM_HEADS):
        q = text @ ca["wq"][h] + ca["bq"][h, 0]
        k = ie @ ca["wk"][h] + ca["bk"][h, 0]
        v = ie @ ca["wv"][h] + ca["bv"][h, 0]
        s = (q @ k.T) / (ATTN_HIDDEN ** 0.5)
        w = jax.nn.softmax(s, axis=-1)
        outs.append(w @ v)
    return jnp.concatenate(outs, axis=-1) @ ca["wo"] + ca["bo"]


def _ref_forward(tp, img, txt, ecg, fusion_technique, fusion_stage):
    if fusion_stage == "early":
        if fusion_technique == "concatenate":
            return _ref_mlp(jnp.concatenate([img, txt, ecg], axis=1),
                            tp["head_concat"])
        fused = _ref_mha(txt, img, ecg, tp["cross_attention"])
        return _ref_mlp(fused, tp["head_xattn"])
    t = _ref_mlp(txt, tp["text_head"])
    i = _ref_mlp(img, tp["image_head"])
    e = _ref_mlp(ecg, tp["ecg_head"])
    return (t + i + e) / 3.0


# --------------------------------- main -------------------------------------
if __name__ == "__main__":
    key = jax.random.PRNGKey(0)
    kp, ki, kt, ke = jax.random.split(key, 4)

    torch_params = init_torch_params(kp)
    params = pack_params(torch_params)

    # Synthetic encoder outputs (stand-ins for ConvNeXtV2 / ClinicalBERT / ECG
    # encoders).
    image_features = jax.random.normal(ki, (BATCH, IMAGE_HIDDEN), jnp.float32)
    text_features = jax.random.normal(kt, (BATCH, TEXT_HIDDEN), jnp.float32)
    ecg_features = jax.random.normal(ke, (BATCH, ECG_HIDDEN), jnp.float32)

    configs = [
        ("concatenate", "early"),
        ("cross_attention", "early"),
        ("concatenate", "late"),
    ]
    ok = True
    for technique, stage in configs:
        out = forward(params, image_features, text_features, ecg_features,
                      fusion_technique=technique, fusion_stage=stage)
        out = jax.block_until_ready(out)
        ref = _ref_forward(torch_params, image_features, text_features,
                           ecg_features, technique, stage)
        if out.shape != (BATCH, NUM_CLASSES):
            ok = False
        if not jnp.allclose(out, ref, atol=2e-3, rtol=2e-3):
            ok = False

    print("KERNEL_OK" if ok else "KERNEL_MISMATCH")
</pallas_src>

<mosaic_0001>
module attributes {stable_mosaic.version = 11 : i64} {
  func.func @_mlp_head_kernel(%arg0: i32, %arg1: memref<128x104xf32, #tpu.memory_space<vmem>>, %arg2: memref<104x52xf32, #tpu.memory_space<vmem>>, %arg3: memref<1x52xf32, #tpu.memory_space<vmem>>, %arg4: memref<52x128xf32, #tpu.memory_space<vmem>>, %arg5: memref<1x128xf32, #tpu.memory_space<vmem>>, %arg6: memref<128x128xf32, #tpu.memory_space<vmem>>) attributes {dimension_semantics = [#tpu.dimension_semantics<parallel>], iteration_bounds = array<i64: 2>, scalar_prefetch = 0 : i64, scratch_operands = 0 : i64, tpu.core_type = #tpu.core_type<tc>, window_params = [{transform_indices = @transform_0, window_bounds = array<i64: 128, 104>}, {pipeline_mode = #tpu.pipeline_mode<synchronous>, transform_indices = @transform_1, window_bounds = array<i64: 104, 52>}, {pipeline_mode = #tpu.pipeline_mode<synchronous>, transform_indices = @transform_2, window_bounds = array<i64: 1, 52>}, {pipeline_mode = #tpu.pipeline_mode<synchronous>, transform_indices = @transform_3, window_bounds = array<i64: 52, 128>}, {pipeline_mode = #tpu.pipeline_mode<synchronous>, transform_indices = @transform_4, window_bounds = array<i64: 1, 128>}, {transform_indices = @transform_5, window_bounds = array<i64: 128, 128>}]} {
    %c0 = arith.constant 0 : index
    %c0_0 = arith.constant 0 : index
    %0 = vector.load %arg1[%c0, %c0_0] : memref<128x104xf32, #tpu.memory_space<vmem>>, vector<128x104xf32>
    %c0_1 = arith.constant 0 : index
    %c0_2 = arith.constant 0 : index
    %1 = vector.load %arg2[%c0_1, %c0_2] : memref<104x52xf32, #tpu.memory_space<vmem>>, vector<104x52xf32>
    %cst = arith.constant dense<0.000000e+00> : vector<128x52xf32>
    %2 = tpu.matmul %0, %1, %cst {dimension_numbers = #tpu.dot_dimension_numbers<[1], [0], [0], [1], [0, 0, 1, 1], [], []>} : vector<128x104xf32>, vector<104x52xf32>, vector<128x52xf32> -> vector<128x52xf32>
    %c0_3 = arith.constant 0 : index
    %c0_4 = arith.constant 0 : index
    %3 = vector.load %arg3[%c0_3, %c0_4] : memref<1x52xf32, #tpu.memory_space<vmem>>, vector<1x52xf32>
    %4 = vector.broadcast %3 : vector<1x52xf32> to vector<128x52xf32>
    %5 = arith.addf %2, %4 : vector<128x52xf32>
    %cst_5 = arith.constant 0.000000e+00 : f32
    %6 = vector.broadcast %cst_5 : f32 to vector<128x52xf32>
    %7 = arith.maximumf %5, %6 : vector<128x52xf32>
    %c0_6 = arith.constant 0 : index
    %c0_7 = arith.constant 0 : index
    %8 = vector.load %arg4[%c0_6, %c0_7] : memref<52x128xf32, #tpu.memory_space<vmem>>, vector<52x128xf32>
    %cst_8 = arith.constant dense<0.000000e+00> : vector<128x128xf32>
    %9 = tpu.matmul %7, %8, %cst_8 {dimension_numbers = #tpu.dot_dimension_numbers<[1], [0], [0], [1], [0, 0, 1, 1], [], []>} : vector<128x52xf32>, vector<52x128xf32>, vector<128x128xf32> -> vector<128x128xf32>
    %c0_9 = arith.constant 0 : index
    %c0_10 = arith.constant 0 : index
    %10 = vector.load %arg5[%c0_9, %c0_10] : memref<1x128xf32, #tpu.memory_space<vmem>>, vector<1x128xf32>
    %11 = vector.broadcast %10 : vector<1x128xf32> to vector<128x128xf32>
    %12 = arith.addf %9, %11 : vector<128x128xf32>
    %c0_11 = arith.constant 0 : index
    %c0_12 = arith.constant 0 : index
    %13 = vector.load %arg6[%c0_11, %c0_12] : memref<128x128xf32, #tpu.memory_space<vmem>>, vector<128x128xf32>
    tpu.vector_store %arg6[%c0_11, %c0_12], %12 {strides = array<i32>} : memref<128x128xf32, #tpu.memory_space<vmem>>, vector<128x128xf32>,
    return
  }
  func.func @transform_0(%arg0: i32) -> (i32, i32) {
    %c0_i32 = arith.constant 0 : i32
    %c0_i32_0 = arith.constant 0 : i32
    return %arg0, %c0_i32 : i32, i32
  }
  func.func @transform_1(%arg0: i32) -> (i32, i32) {
    %c0_i32 = arith.constant 0 : i32
    %c0_i32_0 = arith.constant 0 : i32
    %c0_i32_1 = arith.constant 0 : i32
    return %c0_i32, %c0_i32_0 : i32, i32
  }
  func.func @transform_2(%arg0: i32) -> (i32, i32) {
    %c0_i32 = arith.constant 0 : i32
    %c0_i32_0 = arith.constant 0 : i32
    %c0_i32_1 = arith.constant 0 : i32
    return %c0_i32, %c0_i32_0 : i32, i32
  }
  func.func @transform_3(%arg0: i32) -> (i32, i32) {
    %c0_i32 = arith.constant 0 : i32
    %c0_i32_0 = arith.constant 0 : i32
    %c0_i32_1 = arith.constant 0 : i32
    return %c0_i32, %c0_i32_0 : i32, i32
  }
  func.func @transform_4(%arg0: i32) -> (i32, i32) {
    %c0_i32 = arith.constant 0 : i32
    %c0_i32_0 = arith.constant 0 : i32
    %c0_i32_1 = arith.constant 0 : i32
    return %c0_i32, %c0_i32_0 : i32, i32
  }
  func.func @transform_5(%arg0: i32) -> (i32, i32) {
    %c0_i32 = arith.constant 0 : i32
    %c0_i32_0 = arith.constant 0 : i32
    return %arg0, %c0_i32 : i32, i32
  }
}

</mosaic_0001>

<llo_original>
// kernel: tpu_custom_call.1
$region0: #{tpu_custom_call.1}
  #allocation0 [shape = 'u32[]', space=smem, size = 0x4, offset = 0x4, fixed_abs, tag = 'smem constant byte address 0x4 - core index']
  #allocation1 [shape = 'u32[144,128]{1,0:T(1,128)}', space=vmem, size = 0x12000, scoped, tag = 'internal scratch']
  %s0 = inlined_call_operand.vmem [shape: f32[256,104], index: 0, kind: input, shape index: {}]
  %s1 = inlined_call_operand.vmem [shape: f32[104,52], index: 1, kind: input, shape index: {}]
  %s2 = inlined_call_operand.vmem [shape: f32[1,52], index: 2, kind: input, shape index: {}]
  %s3 = inlined_call_operand.vmem [shape: f32[52,128], index: 3, kind: input, shape index: {}]
  %s4 = inlined_call_operand.vmem [shape: f32[1,128], index: 4, kind: input, shape index: {}]
  %s5 = inlined_call_operand.hbm [shape: f32[256,128], index: 5, kind: output, shape index: {}]
  %s6 = sld [smem:[#allocation0]]
  $region53: #{tpu_custom_call.1} parent=0
    _
  %s8 = ssub.s32 1, %s6
  %s9 = scalar_select 0, %s8, %s6
  $region1: #{tpu_custom_call.1} parent=0
    #allocation2 [shape = 'u8[131072]{0}', space=vmem, size = 0x20000, scoped, tag = 'output window, operand 0']
    #allocation3 [shape = 's32[2]{0}', space=sflag, size = 0x8, scoped, tag = 'scoped memory for tpu_custom_call.1']
    %10 = vsyncpa [#allocation3], 0
    %s11 = scalar_lea.sflag [#allocation3], 1
    %12 = vsyncpa %s11, 0
    loop: start=0, step=1, limit=4
    $region2: #{tpu_custom_call.1} parent=1 // loop_pre_header
      _
    $region3: #{tpu_custom_call.1} parent=1 // loop_header
      %s14 = sphi 0, %s18
      %p15 = scmp.ge.s32.totalorder %s14, 4
      %s24 = sphi 0, %s26
      %s27 = sphi 0, %s24
      %s28 = sphi 0, %s27
      %s44 = sphi 0, %s28
      %s48 = sphi 0, %s48
      %s50 = sphi 0, %s48
      %s51 = sphi 0, %s50
      %s65 = sphi 0, %s51
      %s69 = sphi 0, %s69
      %s71 = sphi 0, %s69
      %s72 = sphi 0, %s71
      %s86 = sphi 0, %s72
      %s90 = sphi 0, %s90
      %s92 = sphi 0, %s90
      %s93 = sphi 0, %s92
      %s107 = sphi 0, %s93
      %s111 = sphi 0, %s111
      %s113 = sphi 0, %s111
      %s114 = sphi 0, %s113
      %s128 = sphi 0, %s114
      %s134 = sphi 0, %s136
      %s137 = sphi 0, %s134
      %s138 = sphi 0, %s137
      %s154 = sphi 0, %s138
    $region4: #{tpu_custom_call.1} parent=1 // loop_header_branch
      %17 = sbr.rel (%p15) target = $region8
    $region5: #{tpu_custom_call.1} parent=1 // loop_body
      %s19 = ssub.s32 %s14, 1
      %s20 = ssub.s32 %s14, 2
      %s21 = sadd.s32 %s14, 1
      %s22 = ssub.s32 %s14, %s21
      %p23 = scmp.eq.s32.totalorder %s22, 0
      %s25 = sadd.s32 %s24, 1
      %s26 = scalar_select %p23, %s24, %s25
      %p29 = pneg %p23
      %p30 = scmp.eq.s32.totalorder %s14, 1
      %p31 = por %p29, %p30
      %p32 = scmp.ne.s32.totalorder %s24, %s27
      %p33 = scmp.eq.s32.totalorder %s14, 0
      %p34 = por %p32, %p33
      %p35 = scmp.ne.s32.totalorder %s24, %s27
      %p36 = scmp.eq.s32.totalorder %s19, 1
      %p37 = por %p35, %p36
      %p38 = scmp.ne.s32.totalorder %s27, %s28
      %p39 = scmp.eq.s32.totalorder %s19, 0
      %p40 = por %p38, %p39
      %p41 = scmp.ne.s32.totalorder %s27, %s28
      %p42 = scmp.eq.s32.totalorder %s20, 1
      %p43 = por %p41, %p42
      %p45 = scmp.ne.s32.totalorder %s28, %s44
      %p46 = scmp.eq.s32.totalorder %s20, 0
      %p47 = por %p45, %p46
      %s49 = sadd.s32 %s48, 1
      %p52 = scmp.eq.s32.totalorder %s14, 1
      %p53 = scmp.ne.s32.totalorder %s48, %s50
      %p54 = scmp.eq.s32.totalorder %s14, 0
      %p55 = por %p53, %p54
      %p56 = scmp.ne.s32.totalorder %s48, %s50
      %p57 = scmp.eq.s32.totalorder %s19, 1
      %p58 = por %p56, %p57
      %p59 = scmp.ne.s32.totalorder %s50, %s51
      %p60 = scmp.eq.s32.totalorder %s19, 0
      %p61 = por %p59, %p60
      %p62 = scmp.ne.s32.totalorder %s50, %s51
      %p63 = scmp.eq.s32.totalorder %s20, 1
      %p64 = por %p62, %p63
      %p66 = scmp.ne.s32.totalorder %s51, %s65
      %p67 = scmp.eq.s32.totalorder %s20, 0
      %p68 = por %p66, %p67
      %s70 = sadd.s32 %s69, 1
      %p73 = scmp.eq.s32.totalorder %s14, 1
      %p74 = scmp.ne.s32.totalorder %s69, %s71
      %p75 = scmp.eq.s32.totalorder %s14, 0
      %p76 = por %p74, %p75
      %p77 = scmp.ne.s32.totalorder %s69, %s71
      %p78 = scmp.eq.s32.totalorder %s19, 1
      %p79 = por %p77, %p78
      %p80 = scmp.ne.s32.totalorder %s71, %s72
      %p81 = scmp.eq.s32.totalorder %s19, 0
      %p82 = por %p80, %p81
      %p83 = scmp.ne.s32.totalorder %s71, %s72
      %p84 = scmp.eq.s32.totalorder %s20, 1
      %p85 = por %p83, %p84
      %p87 = scmp.ne.s32.totalorder %s72, %s86
      %p88 = scmp.eq.s32.totalorder %s20, 0
      %p89 = por %p87, %p88
      %s91 = sadd.s32 %s90, 1
      %p94 = scmp.eq.s32.totalorder %s14, 1
      %p95 = scmp.ne.s32.totalorder %s90, %s92
      %p96 = scmp.eq.s32.totalorder %s14, 0
      %p97 = por %p95, %p96
      %p98 = scmp.ne.s32.totalorder %s90, %s92
      %p99 = scmp.eq.s32.totalorder %s19, 1
      %p100 = por %p98, %p99
      %p101 = scmp.ne.s32.totalorder %s92, %s93
      %p102 = scmp.eq.s32.totalorder %s19, 0
      %p103 = por %p101, %p102
      %p104 = scmp.ne.s32.totalorder %s92, %s93
      %p105 = scmp.eq.s32.totalorder %s20, 1
      %p106 = por %p104, %p105
      %p108 = scmp.ne.s32.totalorder %s93, %s107
      %p109 = scmp.eq.s32.totalorder %s20, 0
      %p110 = por %p108, %p109
      %s112 = sadd.s32 %s111, 1
      %p115 = scmp.eq.s32.totalorder %s14, 1
      %p116 = scmp.ne.s32.totalorder %s111, %s113
      %p117 = scmp.eq.s32.totalorder %s14, 0
      %p118 = por %p116, %p117
      %p119 = scmp.ne.s32.totalorder %s111, %s113
      %p120 = scmp.eq.s32.totalorder %s19, 1
      %p121 = por %p119, %p120
      %p122 = scmp.ne.s32.totalorder %s113, %s114
      %p123 = scmp.eq.s32.totalorder %s19, 0
      %p124 = por %p122, %p123
      %p125 = scmp.ne.s32.totalorder %s113, %s114
      %p126 = scmp.eq.s32.totalorder %s20, 1
      %p127 = por %p125, %p126
      %p129 = scmp.ne.s32.totalorder %s114, %s128
      %p130 = scmp.eq.s32.totalorder %s20, 0
      %p131 = por %p129, %p130
      %s132 = ssub.s32 %s14, %s21
      %p133 = scmp.eq.s32.totalorder %s132, 0
      %s135 = sadd.s32 %s134, 1
      %s136 = scalar_select %p133, %s134, %s135
      %p139 = pneg %p133
      %p140 = scmp.eq.s32.totalorder %s14, 1
      %p141 = por %p139, %p140
      %p142 = scmp.ne.s32.totalorder %s134, %s137
      %p143 = scmp.eq.s32.totalorder %s14, 0
      %p144 = por %p142, %p143
      %p145 = scmp.ne.s32.totalorder %s134, %s137
      %p146 = scmp.eq.s32.totalorder %s19, 1
      %p147 = por %p145, %p146
      %p148 = scmp.ne.s32.totalorder %s137, %s138
      %p149 = scmp.eq.s32.totalorder %s19, 0
      %p150 = por %p148, %p149
      %p151 = scmp.ne.s32.totalorder %s137, %s138
      %p152 = scmp.eq.s32.totalorder %s20, 1
      %p153 = por %p151, %p152
      %p155 = scmp.ne.s32.totalorder %s138, %s154
      %p156 = scmp.eq.s32.totalorder %s20, 0
      %p157 = por %p155, %p156
      %p158 = scmp.le.s32.totalorder 1, %s14
      %p159 = scmp.lt.s32.totalorder %s14, 3
      %p160 = pnand %p158, %p159
      %p161 = pneg %p160
      // Predicated region
      $region9: #{tpu_custom_call.1} parent=5 // pred_check
        _
      $region10: #{tpu_custom_call.1} parent=5 // pred_check_branch
        %163 = sbr.rel (%p160) target = $region12
      $region11: #{tpu_custom_call.1} parent=5 // pred_region
        %s164 = ssub.s32 %s14, 1
        // Predicated region
        $region13: #{tpu_custom_call.1} parent=11 // pred_check
          %p165 = pneg %p61
        $region14: #{tpu_custom_call.1} parent=11 // pred_check_branch
          %167 = sbr.rel (%p165) target = $region16
        $region15: #{tpu_custom_call.1} parent=11 // pred_region
          _
        $region16: #{tpu_custom_call.1} parent=11 // pred_fallthru
          _
        // Predicated region
        $region17: #{tpu_custom_call.1} parent=11 // pred_check
          %p168 = pneg %p82
        $region18: #{tpu_custom_call.1} parent=11 // pred_check_branch
          %170 = sbr.rel (%p168) target = $region20
        $region19: #{tpu_custom_call.1} parent=11 // pred_region
          _
        $region20: #{tpu_custom_call.1} parent=11 // pred_fallthru
          _
        // Predicated region
        $region21: #{tpu_custom_call.1} parent=11 // pred_check
          %p171 = pneg %p103
        $region22: #{tpu_custom_call.1} parent=11 // pred_check_branch
          %173 = sbr.rel (%p171) target = $region24
        $region23: #{tpu_custom_call.1} parent=11 // pred_region
          _
        $region24: #{tpu_custom_call.1} parent=11 // pred_fallthru
          _
        // Predicated region
        $region25: #{tpu_custom_call.1} parent=11 // pred_check
          %p174 = pneg %p124
        $region26: #{tpu_custom_call.1} parent=11 // pred_check_branch
          %176 = sbr.rel (%p174) target = $region28
        $region27: #{tpu_custom_call.1} parent=11 // pred_region
          _
        $region28: #{tpu_custom_call.1} parent=11 // pred_fallthru
          _
      $region12: #{tpu_custom_call.1} parent=5 // pred_fallthru
        _
      %p177 = scmp.lt.s32.totalorder %s14, 2
      // Predicated region
      $region29: #{tpu_custom_call.1} parent=5 // pred_check
        %p178 = pneg %p177
      $region30: #{tpu_custom_call.1} parent=5 // pred_check_branch
        %180 = sbr.rel (%p178) target = $region32
      $region31: #{tpu_custom_call.1} parent=5 // pred_region
        // Predicated region
        $region33: #{tpu_custom_call.1} parent=31 // pred_check
          %p181 = pneg %p34
        $region34: #{tpu_custom_call.1} parent=31 // pred_check_branch
          %183 = sbr.rel (%p181) target = $region36
        $region35: #{tpu_custom_call.1} parent=31 // pred_region
          %s184 = smul.u32 16, %s14
          %p185 = scmp.lt.s32.totalorder %s184, 31
          %s186 = scalar_select %p185, %s184, 31
          %s187 = smul.addr %s186, 8
          %s188 = scalar_lea.vmem %s0, %s187
          %s189 = smul.u32 16, %s14
        $region36: #{tpu_custom_call.1} parent=31 // pred_fallthru
          _
      $region32: #{tpu_custom_call.1} parent=5 // pred_fallthru
        _
      %p190 = scmp.le.s32.totalorder 1, %s14
      %p191 = scmp.lt.s32.totalorder %s14, 3
      %p192 = pnand %p190, %p191
      %p193 = pneg %p192
      // Predicated region
      $region37: #{tpu_custom_call.1} parent=5 // pred_check
        _
      $region38: #{tpu_custom_call.1} parent=5 // pred_check_branch
        %195 = sbr.rel (%p192) target = $region40
      $region39: #{tpu_custom_call.1} parent=5 // pred_region
        %s196 = ssub.s32 %s14, 1
        %s197 = smul.u32 16, %s19
        %p198 = scmp.lt.s32.totalorder %s197, 31
        %s199 = scalar_select %p198, %s197, 31
        %s200 = smul.addr %s199, 8
        %s201 = scalar_lea.vmem %s0, %s200
        %p202 = pneg %p40
        %p203 = pneg %p37
        %p204 = pneg %p61
        %p205 = pneg %p58
        %p206 = pneg %p82
        %p207 = pneg %p79
        %p208 = pneg %p103
        %p209 = pneg %p100
        %p210 = pneg %p124
        %p211 = pneg %p121
        %p212 = pneg %p150
        %p213 = pneg %p147
        %s214 = sand.u32 %s137, 1
        %s215 = scalar_lea.sflag [#allocation3], %s214
        %s216 = sand.u32 %s137, 1
        %s217 = smul.addr %s216, 128
        %s218 = scalar_lea.vmem [#allocation2], %s217
        %s219 = smul.u32 16, %s19
        %p220 = scmp.lt.s32.totalorder %s219, 31
        %s221 = scalar_select %p220, %s219, 31
        %s222 = smul.addr %s221, 8
        %s223 = scalar_lea.vmem %s0, %s222
        %s224 = smul.u32 16, %s19
        %s225 = smul.u32 16, %s19
        %v226 = vld [vmem:[%s223] sm:$0xff]
        %v227 = vld [vmem:[%s223 + $0x8] sm:$0xff]
        %v228 = vld [vmem:[%s223 + $0x10] sm:$0xff]
        %v229 = vld [vmem:[%s223 + $0x18] sm:$0xff]
        %v230 = vld [vmem:[%s223 + $0x20] sm:$0xff]
        %v231 = vld [vmem:[%s223 + $0x28] sm:$0xff]
        %v232 = vld [vmem:[%s223 + $0x30] sm:$0xff]
        %v233 = vld [vmem:[%s223 + $0x38] sm:$0xff]
        %v234 = vld [vmem:[%s223 + $0x40] sm:$0xff]
        %v235 = vld [vmem:[%s223 + $0x48] sm:$0xff]
        %v236 = vld [vmem:[%s223 + $0x50] sm:$0xff]
        %v237 = vld [vmem:[%s223 + $0x58] sm:$0xff]
        %v238 = vld [vmem:[%s223 + $0x60] sm:$0xff]
        %v239 = vld [vmem:[%s223 + $0x68] sm:$0xff]
        %v240 = vld [vmem:[%s223 + $0x70] sm:$0xff]
        %v241 = vld [vmem:[%s223 + $0x78] sm:$0xff]
        %v242 = vld [vmem:[%s1] sm:$0xff]
        %v243 = vld [vmem:[%s1 + $0x8] sm:$0xff]
        %v244 = vld [vmem:[%s1 + $0x10] sm:$0xff]
        %v245 = vld [vmem:[%s1 + $0x18] sm:$0xff]
        %v246 = vld [vmem:[%s1 + $0x20] sm:$0xff]
        %v247 = vld [vmem:[%s1 + $0x28] sm:$0xff]
        %v248 = vld [vmem:[%s1 + $0x30] sm:$0xff]
        %v249 = vld [vmem:[%s1 + $0x38] sm:$0xff]
        %v250 = vld [vmem:[%s1 + $0x40] sm:$0xff]
        %v251 = vld [vmem:[%s1 + $0x48] sm:$0xff]
        %v252 = vld [vmem:[%s1 + $0x50] sm:$0xff]
        %v253 = vld [vmem:[%s1 + $0x58] sm:$0xff]
        %v254 = vld [vmem:[%s1 + $0x60] sm:$0xff]
        %v255 = vld [vmem:[%s2] sm:$0x1]
        %v257 = vlaneseq
        %v258 = vshrl.u32 %v257, 7
        %v259 = vsub.s32 0, %v258
        %v260 = vrot.slane %v255, %v259
        %vm262 = vcmask 850944
        %v264 = vsel %vm262, %v226, 0
        %v267 = vsel %vm262, %v227, 0
        %v270 = vsel %vm262, %v228, 0
        %v273 = vsel %vm262, %v229, 0
        %v276 = vsel %vm262, %v230, 0
        %v279 = vsel %vm262, %v231, 0
        %v282 = vsel %vm262, %v232, 0
        %v285 = vsel %vm262, %v233, 0
        %v288 = vsel %vm262, %v234, 0
        %v291 = vsel %vm262, %v235, 0
        %v294 = vsel %vm262, %v236, 0
        %v297 = vsel %vm262, %v237, 0
        %v300 = vsel %vm262, %v238, 0
        %v303 = vsel %vm262, %v239, 0
        %v306 = vsel %vm262, %v240, 0
        %v309 = vsel %vm262, %v241, 0
        %311 = vmatprep.subr.mxu0 0.0
        %312 = vmatpush1.msra.mxu0 %v242
        %313 = vmatprep.subr.mxu0 0.0
        %314 = vmatpush1.msra.mxu0 %v243
        %315 = vmatprep.subr.mxu0 0.0
        %316 = vmatpush1.msra.mxu0 %v244
        %317 = vmatprep.subr.mxu0 0.0
        %318 = vmatpush1.msra.mxu0 %v245
        %319 = vmatprep.subr.mxu0 0.0
        %320 = vmatpush1.msra.mxu0 %v246
        %321 = vmatprep.subr.mxu0 0.0
        %322 = vmatpush1.msra.mxu0 %v247
        %323 = vmatprep.subr.mxu0 0.0
        %324 = vmatpush1.msra.mxu0 %v248
        %325 = vmatprep.subr.mxu0 0.0
        %326 = vmatpush1.msra.mxu0 %v249
        %327 = vmatprep.subr.mxu0 0.0
        %328 = vmatpush1.msra.mxu0 %v250
        %329 = vmatprep.subr.mxu0 0.0
        %330 = vmatpush1.msra.mxu0 %v251
        %331 = vmatprep.subr.mxu0 0.0
        %332 = vmatpush1.msra.mxu0 %v252
        %333 = vmatprep.subr.mxu0 0.0
        %334 = vmatpush1.msra.mxu0 %v253
        %335 = vmatprep.subr.mxu0 0.0
        %336 = vmatpush1.msra.mxu0 %v254
        %337 = vmatprep.subr.mxu0 0.0
        %338 = vmatpush1.msra.mxu0 0.0
        %339 = vmatprep.subr.mxu0 0.0
        %340 = vmatpush1.msra.mxu0 0.0
        %341 = vmatprep.subr.mxu0 0.0
        %342 = vmatpush1.msra.mxu0 0.0
        %343 = vmatprep.subr.mxu0 0.0
        %344 = vmatpush1.msra.mxu0 0.0
        %345 = vmatprep.subr.mxu0 0.0
        %346 = vmatpush1.msra.mxu0 0.0
        %347 = vmatprep.subr.mxu0 0.0
        %348 = vmatpush1.msra.mxu0 0.0
        %349 = vmatprep.subr.mxu0 0.0
        %350 = vmatpush1.msra.mxu0 0.0
        %351 = vmatprep.subr.mxu0 0.0
        %352 = vmatpush1.msra.mxu0 0.0
        %353 = vmatprep.subr.mxu0 0.0
        %354 = vmatpush1.msra.mxu0 0.0
        %355 = vmatprep.subr.mxu0 0.0
        %356 = vmatpush1.msra.mxu0 0.0
        %357 = vmatprep.subr.mxu0 0.0
        %358 = vmatpush1.msra.mxu0 0.0
        %359 = vmatprep.subr.mxu0 0.0
        %360 = vmatpush1.msra.mxu0 0.0
        %361 = vmatprep.subr.mxu0 0.0
        %362 = vmatpush1.msra.mxu0 0.0
        %363 = vmatprep.subr.mxu0 0.0
        %364 = vmatpush1.msra.mxu0 0.0
        %365 = vmatprep.subr.mxu0 0.0
        %366 = vmatpush1.msra.mxu0 0.0
        %367 = vmatprep.subr.mxu0 0.0
        %368 = vmatpush1.msra.mxu0 0.0
        %369 = vmatprep.subr.mxu0 0.0
        %370 = vmatpush1.msra.mxu0 0.0
        %371 = vmatprep.subr.mxu0 0.0
        %372 = vmatpush1.msra.mxu0 0.0
        %373 = vmatprep.subr.mxu0 0.0
        %374 = vmatpush1.msra.mxu0 0.0
        %375 = vmatprep.mubr.f32.mxu0 0.0
        %376 = vmatmul.mubr.f32.gmra.mrb[0].mxu0 %v264
        %v377 = vpop.f32.mrb[0].mxu0
        %v378 = vadd.f32 %v260, %v377
        %v379 = vpop.f32.mrb[0].mxu0
        %380 = vmatprep.mubr.f32.mxu0 0.0
        %381 = vmatmul.mubr.f32.gmra.mrb[0].mxu0 %v267
        %v382 = vpop.f32.mrb[0].mxu0
        %v383 = vadd.f32 %v260, %v382
        %v384 = vpop.f32.mrb[0].mxu0
        %385 = vmatprep.mubr.f32.mxu0 0.0
        %386 = vmatmul.mubr.f32.gmra.mrb[0].mxu0 %v270
        %v387 = vpop.f32.mrb[0].mxu0
        %v388 = vadd.f32 %v260, %v387
        %v389 = vpop.f32.mrb[0].mxu0
        %390 = vmatprep.mubr.f32.mxu0 0.0
        %391 = vmatmul.mubr.f32.gmra.mrb[0].mxu0 %v273
        %v392 = vpop.f32.mrb[0].mxu0
        %v393 = vadd.f32 %v260, %v392
        %v394 = vpop.f32.mrb[0].mxu0
        %395 = vmatprep.mubr.f32.mxu0 0.0
        %396 = vmatmul.mubr.f32.gmra.mrb[0].mxu0 %v276
        %v397 = vpop.f32.mrb[0].mxu0
        %v398 = vadd.f32 %v260, %v397
        %v399 = vpop.f32.mrb[0].mxu0
        %400 = vmatprep.mubr.f32.mxu0 0.0
        %401 = vmatmul.mubr.f32.gmra.mrb[0].mxu0 %v279
        %v402 = vpop.f32.mrb[0].mxu0
        %v403 = vadd.f32 %v260, %v402
        %v404 = vpop.f32.mrb[0].mxu0
        %405 = vmatprep.mubr.f32.mxu0 0.0
        %406 = vmatmul.mubr.f32.gmra.mrb[0].mxu0 %v282
        %v407 = vpop.f32.mrb[0].mxu0
        %v408 = vadd.f32 %v260, %v407
        %v409 = vpop.f32.mrb[0].mxu0
        %410 = vmatprep.mubr.f32.mxu0 0.0
        %411 = vmatmul.mubr.f32.gmra.mrb[0].mxu0 %v285
        %v412 = vpop.f32.mrb[0].mxu0
        %v413 = vadd.f32 %v260, %v412
        %v414 = vpop.f32.mrb[0].mxu0
        %415 = vmatprep.mubr.f32.mxu0 0.0
        %416 = vmatmul.mubr.f32.gmra.mrb[0].mxu0 %v288
        %v417 = vpop.f32.mrb[0].mxu0
        %v418 = vadd.f32 %v260, %v417
        %v419 = vpop.f32.mrb[0].mxu0
        %420 = vmatprep.mubr.f32.mxu0 0.0
        %421 = vmatmul.mubr.f32.gmra.mrb[0].mxu0 %v291
        %v422 = vpop.f32.mrb[0].mxu0
        %v423 = vadd.f32 %v260, %v422
        %v424 = vpop.f32.mrb[0].mxu0
        %425 = vmatprep.mubr.f32.mxu0 0.0
        %426 = vmatmul.mubr.f32.gmra.mrb[0].mxu0 %v294
        %v427 = vpop.f32.mrb[0].mxu0
        %v428 = vadd.f32 %v260, %v427
        %v429 = vpop.f32.mrb[0].mxu0
        %430 = vmatprep.mubr.f32.mxu0 0.0
        %431 = vmatmul.mubr.f32.gmra.mrb[0].mxu0 %v297
        %v432 = vpop.f32.mrb[0].mxu0
        %v433 = vadd.f32 %v260, %v432
        %v434 = vpop.f32.mrb[0].mxu0
        %435 = vmatprep.mubr.f32.mxu0 0.0
        %436 = vmatmul.mubr.f32.gmra.mrb[0].mxu0 %v300
        %v437 = vpop.f32.mrb[0].mxu0
        %v438 = vadd.f32 %v260, %v437
        %v439 = vpop.f32.mrb[0].mxu0
        %440 = vmatprep.mubr.f32.mxu0 0.0
        %441 = vmatmul.mubr.f32.gmra.mrb[0].mxu0 %v303
        %v442 = vpop.f32.mrb[0].mxu0
        %v443 = vadd.f32 %v260, %v442
        %v444 = vpop.f32.mrb[0].mxu0
        %445 = vmatprep.mubr.f32.mxu0 0.0
        %446 = vmatmul.mubr.f32.gmra.mrb[0].mxu0 %v306
        %v447 = vpop.f32.mrb[0].mxu0
        %v448 = vadd.f32 %v260, %v447
        %v449 = vpop.f32.mrb[0].mxu0
        %450 = vmatprep.mubr.f32.mxu0 0.0
        %451 = vmatmul.mubr.f32.gmra.mrb[0].mxu0 %v309
        %v452 = vpop.f32.mrb[0].mxu0
        %v453 = vadd.f32 %v260, %v452
        %v454 = vpop.f32.mrb[0].mxu0
        %455 = vdwg.mxu0
        %v456 = vmax.f32 %v378, 0.0
        %v457 = vmax.f32 %v383, 0.0
        %v458 = vmax.f32 %v388, 0.0
        %v459 = vmax.f32 %v393, 0.0
        %v460 = vmax.f32 %v398, 0.0
        %v461 = vmax.f32 %v403, 0.0
        %v462 = vmax.f32 %v408, 0.0
        %v463 = vmax.f32 %v413, 0.0
        %v464 = vmax.f32 %v418, 0.0
        %v465 = vmax.f32 %v423, 0.0
        %v466 = vmax.f32 %v428, 0.0
        %v467 = vmax.f32 %v433, 0.0
        %v468 = vmax.f32 %v438, 0.0
        %v469 = vmax.f32 %v443, 0.0
        %v470 = vmax.f32 %v448, 0.0
        %v471 = vmax.f32 %v453, 0.0
        %v472 = vld [vmem:[%s3] sm:$0xff]
        %v473 = vld [vmem:[%s3 + $0x8] sm:$0xff]
        %v474 = vld [vmem:[%s3 + $0x10] sm:$0xff]
        %v475 = vld [vmem:[%s3 + $0x18] sm:$0xff]
        %v476 = vld [vmem:[%s3 + $0x20] sm:$0xff]
        %v477 = vld [vmem:[%s3 + $0x28] sm:$0xff]
        %v478 = vld [vmem:[%s3 + $0x30] sm:$0xf]
        %v479 = vld [vmem:[%s4] sm:$0x1]
        %v481 = vlaneseq
        %v482 = vshrl.u32 %v481, 7
        %v483 = vsub.s32 0, %v482
        %v484 = vrot.slane %v479, %v483
        %vm486 = vcmask 424960
        %v488 = vsel %vm486, %v456, 0
        %v491 = vsel %vm486, %v457, 0
        %v494 = vsel %vm486, %v458, 0
        %v497 = vsel %vm486, %v459, 0
        %v500 = vsel %vm486, %v460, 0
        %v503 = vsel %vm486, %v461, 0
        %v506 = vsel %vm486, %v462, 0
        %v509 = vsel %vm486, %v463, 0
        %v512 = vsel %vm486, %v464, 0
        %v515 = vsel %vm486, %v465, 0
        %v518 = vsel %vm486, %v466, 0
        %v521 = vsel %vm486, %v467, 0
        %v524 = vsel %vm486, %v468, 0
        %v527 = vsel %vm486, %v469, 0
        %v530 = vsel %vm486, %v470, 0
        %v533 = vsel %vm486, %v471, 0
        %vm535 = vcmask 1043456
        %v537 = vsel %vm535, %v478, 0
        %539 = vmatprep.subr.mxu0 0.0
        %540 = vmatpush1.msra.mxu0 %v472
        %541 = vmatprep.subr.mxu0 0.0
        %542 = vmatpush1.msra.mxu0 %v473
        %543 = vmatprep.subr.mxu0 0.0
        %544 = vmatpush1.msra.mxu0 %v474
        %545 = vmatprep.subr.mxu0 0.0
        %546 = vmatpush1.msra.mxu0 %v475
        %547 = vmatprep.subr.mxu0 0.0
        %548 = vmatpush1.msra.mxu0 %v476
        %549 = vmatprep.subr.mxu0 0.0
        %550 = vmatpush1.msra.mxu0 %v477
        %551 = vmatprep.subr.mxu0 0.0
        %552 = vmatpush1.msra.mxu0 %v537
        %553 = vmatprep.subr.mxu0 0.0
        %554 = vmatpush1.msra.mxu0 0.0
        %555 = vmatprep.subr.mxu0 0.0
        %556 = vmatpush1.msra.mxu0 0.0
        %557 = vmatprep.subr.mxu0 0.0
        %558 = vmatpush1.msra.mxu0 0.0
        %559 = vmatprep.subr.mxu0 0.0
        %560 = vmatpush1.msra.mxu0 0.0
        %561 = vmatprep.subr.mxu0 0.0
        %562 = vmatpush1.msra.mxu0 0.0
        %563 = vmatprep.subr.mxu0 0.0
        %564 = vmatpush1.msra.mxu0 0.0
        %565 = vmatprep.subr.mxu0 0.0
        %566 = vmatpush1.msra.mxu0 0.0
        %567 = vmatprep.subr.mxu0 0.0
        %568 = vmatpush1.msra.mxu0 0.0
        %569 = vmatprep.subr.mxu0 0.0
        %570 = vmatpush1.msra.mxu0 0.0
        %571 = vmatprep.subr.mxu0 0.0
        %572 = vmatpush1.msra.mxu0 0.0
        %573 = vmatprep.subr.mxu0 0.0
        %574 = vmatpush1.msra.mxu0 0.0
        %575 = vmatprep.subr.mxu0 0.0
        %576 = vmatpush1.msra.mxu0 0.0
        %577 = vmatprep.subr.mxu0 0.0
        %578 = vmatpush1.msra.mxu0 0.0
        %579 = vmatprep.subr.mxu0 0.0
        %580 = vmatpush1.msra.mxu0 0.0
        %581 = vmatprep.subr.mxu0 0.0
        %582 = vmatpush1.msra.mxu0 0.0
        %583 = vmatprep.subr.mxu0 0.0
        %584 = vmatpush1.msra.mxu0 0.0
        %585 = vmatprep.subr.mxu0 0.0
        %586 = vmatpush1.msra.mxu0 0.0
        %587 = vmatprep.subr.mxu0 0.0
        %588 = vmatpush1.msra.mxu0 0.0
        %589 = vmatprep.subr.mxu0 0.0
        %590 = vmatpush1.msra.mxu0 0.0
        %591 = vmatprep.subr.mxu0 0.0
        %592 = vmatpush1.msra.mxu0 0.0
        %593 = vmatprep.subr.mxu0 0.0
        %594 = vmatpush1.msra.mxu0 0.0
        %595 = vmatprep.subr.mxu0 0.0
        %596 = vmatpush1.msra.mxu0 0.0
        %597 = vmatprep.subr.mxu0 0.0
        %598 = vmatpush1.msra.mxu0 0.0
        %599 = vmatprep.subr.mxu0 0.0
        %600 = vmatpush1.msra.mxu0 0.0
        %601 = vmatprep.subr.mxu0 0.0
        %602 = vmatpush1.msra.mxu0 0.0
        %603 = vmatprep.mubr.f32.mxu0 0.0
        %604 = vmatmul.mubr.f32.gmra.mrb[0].mxu0 %v488
        %v605 = vpop.f32.mrb[0].mxu0
        %v606 = vadd.f32 %v484, %v605
        %v607 = vpop.f32.mrb[0].mxu0
        %608 = vmatprep.mubr.f32.mxu0 0.0
        %609 = vmatmul.mubr.f32.gmra.mrb[0].mxu0 %v491
        %v610 = vpop.f32.mrb[0].mxu0
        %v611 = vadd.f32 %v484, %v610
        %v612 = vpop.f32.mrb[0].mxu0
        %613 = vmatprep.mubr.f32.mxu0 0.0
        %614 = vmatmul.mubr.f32.gmra.mrb[0].mxu0 %v494
        %v615 = vpop.f32.mrb[0].mxu0
        %v616 = vadd.f32 %v484, %v615
        %v617 = vpop.f32.mrb[0].mxu0
        %618 = vmatprep.mubr.f32.mxu0 0.0
        %619 = vmatmul.mubr.f32.gmra.mrb[0].mxu0 %v497
        %v620 = vpop.f32.mrb[0].mxu0
        %v621 = vadd.f32 %v484, %v620
        %v622 = vpop.f32.mrb[0].mxu0
        %623 = vmatprep.mubr.f32.mxu0 0.0
        %624 = vmatmul.mubr.f32.gmra.mrb[0].mxu0 %v500
        %v625 = vpop.f32.mrb[0].mxu0
        %v626 = vadd.f32 %v484, %v625
        %v627 = vpop.f32.mrb[0].mxu0
        %628 = vmatprep.mubr.f32.mxu0 0.0
        %629 = vmatmul.mubr.f32.gmra.mrb[0].mxu0 %v503
        %v630 = vpop.f32.mrb[0].mxu0
        %v631 = vadd.f32 %v484, %v630
        %v632 = vpop.f32.mrb[0].mxu0
        %633 = vmatprep.mubr.f32.mxu0 0.0
        %634 = vmatmul.mubr.f32.gmra.mrb[0].mxu0 %v506
        %v635 = vpop.f32.mrb[0].mxu0
        %v636 = vadd.f32 %v484, %v635
        %v637 = vpop.f32.mrb[0].mxu0
        %638 = vmatprep.mubr.f32.mxu0 0.0
        %639 = vmatmul.mubr.f32.gmra.mrb[0].mxu0 %v509
        %v640 = vpop.f32.mrb[0].mxu0
        %v641 = vadd.f32 %v484, %v640
        %v642 = vpop.f32.mrb[0].mxu0
        %643 = vmatprep.mubr.f32.mxu0 0.0
        %644 = vmatmul.mubr.f32.gmra.mrb[0].mxu0 %v512
        %v645 = vpop.f32.mrb[0].mxu0
        %v646 = vadd.f32 %v484, %v645
        %v647 = vpop.f32.mrb[0].mxu0
        %648 = vmatprep.mubr.f32.mxu0 0.0
        %649 = vmatmul.mubr.f32.gmra.mrb[0].mxu0 %v515
        %v650 = vpop.f32.mrb[0].mxu0
        %v651 = vadd.f32 %v484, %v650
        %v652 = vpop.f32.mrb[0].mxu0
        %653 = vmatprep.mubr.f32.mxu0 0.0
        %654 = vmatmul.mubr.f32.gmra.mrb[0].mxu0 %v518
        %v655 = vpop.f32.mrb[0].mxu0
        %v656 = vadd.f32 %v484, %v655
        %v657 = vpop.f32.mrb[0].mxu0
        %658 = vmatprep.mubr.f32.mxu0 0.0
        %659 = vmatmul.mubr.f32.gmra.mrb[0].mxu0 %v521
        %v660 = vpop.f32.mrb[0].mxu0
        %v661 = vadd.f32 %v484, %v660
        %v662 = vpop.f32.mrb[0].mxu0
        %663 = vmatprep.mubr.f32.mxu0 0.0
        %664 = vmatmul.mubr.f32.gmra.mrb[0].mxu0 %v524
        %v665 = vpop.f32.mrb[0].mxu0
        %v666 = vadd.f32 %v484, %v665
        %v667 = vpop.f32.mrb[0].mxu0
        %668 = vmatprep.mubr.f32.mxu0 0.0
        %669 = vmatmul.mubr.f32.gmra.mrb[0].mxu0 %v527
        %v670 = vpop.f32.mrb[0].mxu0
        %v671 = vadd.f32 %v484, %v670
        %v672 = vpop.f32.mrb[0].mxu0
        %673 = vmatprep.mubr.f32.mxu0 0.0
        %674 = vmatmul.mubr.f32.gmra.mrb[0].mxu0 %v530
        %v675 = vpop.f32.mrb[0].mxu0
        %v676 = vadd.f32 %v484, %v675
        %v677 = vpop.f32.mrb[0].mxu0
        %678 = vmatprep.mubr.f32.mxu0 0.0
        %679 = vmatmul.mubr.f32.gmra.mrb[0].mxu0 %v533
        %v680 = vpop.f32.mrb[0].mxu0
        %v681 = vadd.f32 %v484, %v680
        %v682 = vpop.f32.mrb[0].mxu0
        %683 = vdwg.mxu0
        %684 = vst [vmem:[%s218] sm:$0xff] %v606
        %685 = vst [vmem:[%s218 + $0x8] sm:$0xff] %v611
        %686 = vst [vmem:[%s218 + $0x10] sm:$0xff] %v616
        %687 = vst [vmem:[%s218 + $0x18] sm:$0xff] %v621
        %688 = vst [vmem:[%s218 + $0x20] sm:$0xff] %v626
        %689 = vst [vmem:[%s218 + $0x28] sm:$0xff] %v631
        %690 = vst [vmem:[%s218 + $0x30] sm:$0xff] %v636
        %691 = vst [vmem:[%s218 + $0x38] sm:$0xff] %v641
        %692 = vst [vmem:[%s218 + $0x40] sm:$0xff] %v646
        %693 = vst [vmem:[%s218 + $0x48] sm:$0xff] %v651
        %694 = vst [vmem:[%s218 + $0x50] sm:$0xff] %v656
        %695 = vst [vmem:[%s218 + $0x58] sm:$0xff] %v661
        %696 = vst [vmem:[%s218 + $0x60] sm:$0xff] %v666
        %697 = vst [vmem:[%s218 + $0x68] sm:$0xff] %v671
        %698 = vst [vmem:[%s218 + $0x70] sm:$0xff] %v676
        %699 = vst [vmem:[%s218 + $0x78] sm:$0xff] %v681
        %s700 = sand.u32 %s137, 1
        %s701 = scalar_lea.sflag [#allocation3], %s700
        %s702 = sand.u32 %s137, 1
        %s703 = smul.addr %s702, 128
        %s704 = scalar_lea.vmem [#allocation2], %s703
        // Predicated region
        $region41: #{tpu_custom_call.1} parent=39 // pred_check
          %p705 = pneg %p147
        $region42: #{tpu_custom_call.1} parent=39 // pred_check_branch
          %707 = sbr.rel (%p705) target = $region44
        $region43: #{tpu_custom_call.1} parent=39 // pred_region
          %s708 = smul.u32 16, %s19
          %s710 = ssub.s32 2048, 2048
          %711 = vsyncadd %s701, %s710
          %s712 = smul.addr %s708, 128
          %s713 = scalar_lea.hbm %s5, %s712
          %s714 = sshll.u32 %s704, 4
          %s715 = int_to_ptr.vmem [resolvable:$true] %s714
          %720 = dma.vmem_to_hbm [thread:$0]  %s715, 2048, %s713, %s701, 128, 128, 8
        $region44: #{tpu_custom_call.1} parent=39 // pred_fallthru
          _
      $region40: #{tpu_custom_call.1} parent=5 // pred_fallthru
        _
      %p721 = scmp.le.s32.totalorder 2, %s14
      // Predicated region
      $region45: #{tpu_custom_call.1} parent=5 // pred_check
        %p722 = pneg %p721
      $region46: #{tpu_custom_call.1} parent=5 // pred_check_branch
        %724 = sbr.rel (%p722) target = $region48
      $region47: #{tpu_custom_call.1} parent=5 // pred_region
        %s725 = ssub.s32 %s14, 2
        // Predicated region
        $region49: #{tpu_custom_call.1} parent=47 // pred_check
          %p726 = pneg %p153
        $region50: #{tpu_custom_call.1} parent=47 // pred_check_branch
          %728 = sbr.rel (%p726) target = $region52
        $region51: #{tpu_custom_call.1} parent=47 // pred_region
          %s729 = sand.u32 %s138, 1
          %s730 = scalar_lea.sflag [#allocation3], %s729
          %s731 = sand.u32 %s138, 1
          %s732 = smul.addr %s731, 128
          %s733 = scalar_lea.vmem [#allocation2], %s732
          %734 = dma.done %s730, 2048
        $region52: #{tpu_custom_call.1} parent=47 // pred_fallthru
          _
      $region48: #{tpu_custom_call.1} parent=5 // pred_fallthru
        _
    $region6: #{tpu_custom_call.1} parent=1 // loop_footer
      %s18 = sadd.s32 1, %s14
    $region7: #{tpu_custom_call.1} parent=1 // loop_footer_branch
      %13 = sbr.rel target = $region3
    $region8: #{tpu_custom_call.1} parent=1 // loop_exit
      _
    %735 = vsyncpa [#allocation3], 1
    %s736 = scalar_lea.sflag [#allocation3], 1
    %737 = vsyncpa %s736, 1

</llo_original>
